<compile_context>
chip_gen: v7x
topology: tpu7x:2x2x1
jax: 0.10.0
libtpu: 0.0.40
codegen_flags: <defaults>
</compile_context>

<pallas_src>
import functools
import math

import jax
import jax.numpy as jnp
from jax.experimental import pallas as pl
from jax.experimental.pallas import tpu as pltpu

K = 5          # conv kernel size
PAD = 2        # "same" padding for k=5

C1, C2, C3 = 16, 32, 16   # hidden channel widths (conv1/conv2/conv3 outputs)

# ---- packed-parameter layout: single (P_ROWS, P_COLS) f32 buffer, one DMA ----
ROW_W2 = 0                 # rows [ 0,32) cols [0, 80)  conv2 im2col weight (32, K*16)
ROW_W3 = ROW_W2 + C2       # rows [32,48) cols [0,160)  conv3 im2col weight (16, K*32)
ROW_W1 = ROW_W3 + C3       # rows [48,64) cols [0,  5)  conv1 taps (Cout=16, K)
ROW_W4 = ROW_W1 + C1       # rows [64,80) cols [0,  5)  conv4 taps (Cin=16,  K)
P_ROWS = ROW_W4 + C3       # 80
BIAS_COL = K * C2          # 160: column holding every layer's bias
P_COLS = BIAS_COL + 1      # 161


def _cnn_kernel(x_ref, p_ref, o_ref, *, seg_len, valid_len, use_bf16):
    """x_ref / o_ref: (1, B*seg_len) f32 — batch packed along the lane axis."""
    _, n_lanes = x_ref.shape

    lane = jax.lax.broadcasted_iota(jnp.int32, (1, n_lanes), 1)
    valid = (lane % seg_len) < valid_len            # per-segment pad-lane mask

    # ---- unpack the single packed parameter buffer (tiny, loaded once) ----
    w2 = p_ref[ROW_W2:ROW_W2 + C2, 0:K * C1]                   # (32, 80)
    w3 = p_ref[ROW_W3:ROW_W3 + C3, 0:K * C2]                   # (16, 160)
    w1 = p_ref[ROW_W1:ROW_W1 + C1, 0:K]                        # (16, 5)  (Cout, tap)
    w4 = p_ref[ROW_W4:ROW_W4 + C3, 0:K]                        # (16, 5)  (Cin,  tap)
    b2 = p_ref[ROW_W2:ROW_W2 + C2, BIAS_COL:BIAS_COL + 1]      # (32, 1)
    b3 = p_ref[ROW_W3:ROW_W3 + C3, BIAS_COL:BIAS_COL + 1]      # (16, 1)
    b1 = p_ref[ROW_W1:ROW_W1 + C1, BIAS_COL:BIAS_COL + 1]      # (16, 1)
    b4 = p_ref[ROW_W4:ROW_W4 + 1,  BIAS_COL:BIAS_COL + 1]      # (1, 1)

    mxu_dtype = jnp.bfloat16 if use_bf16 else jnp.float32

    def rolled(h, k):
        # Tap k of a "same" conv: result[:, j] == h[:, j + k - PAD].  Cyclic
        # wrap only ever pulls pad-zero lanes (each segment ends in >= PAD
        # zero lanes; pads are re-zeroed every layer).
        s = (PAD - k) % n_lanes
        return h if s == 0 else pltpu.roll(h, s, 1)

    def im2col(h):
        # Stack the K shifted copies along sublanes -> (K*Cin, n_lanes) so the
        # whole conv is one MXU dot with contraction K*Cin (80 / 160).
        return jnp.concatenate([rolled(h, k) for k in range(K)], axis=0)

    x0 = x_ref[...]                                   # (1, n_lanes), pads already zero

    # conv1: 1 -> 16.  Degenerate Cin: 5 VPU broadcast-FMAs, no MXU.
    acc = w1[:, 0:1] * rolled(x0, 0)
    for k in range(1, K):
        acc = acc + w1[:, k:k + 1] * rolled(x0, k)    # (16,1)*(1,n_lanes)
    h = jnp.where(valid, jnp.maximum(acc + b1, 0.0), 0.0)

    # conv2: 16 -> 32.  One im2col MXU dot, contraction 80.
    a = jnp.dot(w2.astype(mxu_dtype), im2col(h).astype(mxu_dtype),
                preferred_element_type=jnp.float32) + b2
    h = jnp.where(valid, jnp.maximum(a, 0.0), 0.0)

    # conv3: 32 -> 16.  One im2col MXU dot, contraction 160.
    a = jnp.dot(w3.astype(mxu_dtype), im2col(h).astype(mxu_dtype),
                preferred_element_type=jnp.float32) + b3
    h = jnp.where(valid, jnp.maximum(a, 0.0), 0.0)

    # conv4: 16 -> 1.  Degenerate Cout: VPU FMAs + one cross-sublane reduce.
    acc = w4[:, 0:1] * rolled(h, 0)
    for k in range(1, K):
        acc = acc + w4[:, k:k + 1] * rolled(h, k)     # (16,1)*(16,n_lanes)
    y = jnp.sum(acc, axis=0, keepdims=True) + b4      # (1, n_lanes)

    o_ref[...] = y.astype(o_ref.dtype)                # lane-dense B*128-wide store


def _pack_params(params):
    """PyTorch layout (Cout,Cin,K)/(Cout,) -> one packed (P_ROWS, P_COLS) buffer."""
    (w1, b1), (w2, b2), (w3, b3), (w4, b4) = params
    # im2col-flattened weights: W_flat[o, k*Cin + c] = w_torch[o, c, k]
    w2f = jnp.transpose(w2.astype(jnp.float32), (0, 2, 1)).reshape(C2, K * C1)
    w3f = jnp.transpose(w3.astype(jnp.float32), (0, 2, 1)).reshape(C3, K * C2)
    w1t = w1[:, 0, :].astype(jnp.float32)             # (16, K)  (Cout, tap)
    w4t = w4[0].astype(jnp.float32)                   # (16, K)  (Cin,  tap)

    p = jnp.zeros((P_ROWS, P_COLS), jnp.float32)
    p = p.at[ROW_W2:ROW_W2 + C2, 0:K * C1].set(w2f)
    p = p.at[ROW_W3:ROW_W3 + C3, 0:K * C2].set(w3f)
    p = p.at[ROW_W1:ROW_W1 + C1, 0:K].set(w1t)
    p = p.at[ROW_W4:ROW_W4 + C3, 0:K].set(w4t)
    p = p.at[ROW_W2:ROW_W2 + C2, BIAS_COL].set(b2.astype(jnp.float32))
    p = p.at[ROW_W3:ROW_W3 + C3, BIAS_COL].set(b3.astype(jnp.float32))
    p = p.at[ROW_W1:ROW_W1 + C1, BIAS_COL].set(b1.astype(jnp.float32))
    p = p.at[ROW_W4, BIAS_COL].set(b4[0].astype(jnp.float32))
    return p


def cnn_inverse_heat_forward(x_ncl, params, *, batch_block=None, use_bf16_mxu=False):
    """x_ncl: (N, 1, L) float32 (PyTorch NCL layout). Returns (N, 1, L).

    batch_block: batch elements per grid step. None (default) = whole batch in
      one grid step (best on single-TC v5e/v6e).  On v7x pass N//2 so the two
      TensorCores each take half the batch ("parallel" grid axis).
    use_bf16_mxu: cast conv2/conv3 im2col operands to bf16 (single-pass MXU,
      ~2-3x throughput) with f32 accumulation; off by default to keep the
      f32 verification tolerance tight.
    """
    N, C, L = x_ncl.shape
    assert C == 1
    # Pad each length-L segment to a lane multiple with >= PAD trailing zeros
    # so cyclic lane rolls reproduce exact zero-padding semantics.
    Lp = ((L + PAD + 127) // 128) * 128
    B = N if batch_block is None else batch_block
    assert N % B == 0, "batch_block must divide N"

    # Batch-on-lanes packing: (N, 1, L) -> one lane-dense row (1, N*Lp).
    x_p = jnp.pad(x_ncl.astype(jnp.float32).reshape(N, L), ((0, 0), (0, Lp - L)))
    x_p = x_p.reshape(1, N * Lp)
    p_packed = _pack_params(params)

    grid_spec = pltpu.PrefetchScalarGridSpec(
        num_scalar_prefetch=0,
        grid=(N // B,),
        in_specs=[pl.BlockSpec((1, B * Lp), lambda g: (0, g)),
                  pl.BlockSpec(p_packed.shape, lambda g: (0, 0))],
        out_specs=pl.BlockSpec((1, B * Lp), lambda g: (0, g)),
    )

    out_p = pl.pallas_call(
        functools.partial(_cnn_kernel, seg_len=Lp, valid_len=L,
                          use_bf16=use_bf16_mxu),
        out_shape=jax.ShapeDtypeStruct((1, N * Lp), jnp.float32),
        grid_spec=grid_spec,
        compiler_params=pltpu.CompilerParams(
            dimension_semantics=("parallel",)),
    )(x_p, p_packed)

    return out_p.reshape(N, Lp)[:, :L].reshape(N, 1, L)


def init_params(key):
    """PyTorch-style init.  Weight (Cout, Cin, K), bias (Cout,)."""
    layer_dims = [(1, 16), (16, 32), (32, 16), (16, 1)]
    params = []
    for i, (cin, cout) in enumerate(layer_dims):
        kw, kb = jax.random.split(jax.random.fold_in(key, i))
        bound = 1.0 / math.sqrt(cin * K)
        w = jax.random.uniform(kw, (cout, cin, K), jnp.float32, -bound, bound)
        b = jax.random.uniform(kb, (cout,), jnp.float32, -bound, bound)
        params.append((w, b))
    return params


def _reference_forward(x_ncl, params):
    """Pure-JAX reference using lax.conv_general_dilated (NCL / OIW)."""
    h = x_ncl
    for i, (w, b) in enumerate(params):
        h = jax.lax.conv_general_dilated(
            h, w, window_strides=(1,), padding=((PAD, PAD),),
            dimension_numbers=("NCH", "OIH", "NCH"))
        h = h + b.reshape(1, -1, 1)
        if i < len(params) - 1:
            h = jnp.maximum(h, 0.0)
    return h


if __name__ == "__main__":
    key = jax.random.PRNGKey(0)
    N, L = 2, 100                                  # Nx = 100 from the module
    x = jax.random.normal(key, (N, 1, L), jnp.float32)

    params = init_params(jax.random.PRNGKey(42))

    out = cnn_inverse_heat_forward(x, params)      # f32 MXU path (verification)
    out = jax.block_until_ready(out)

    ref = jax.block_until_ready(_reference_forward(x, params))
    assert out.shape == (N, 1, L)
    assert jnp.allclose(out, ref, atol=1e-4, rtol=1e-4)

    # TODO(synk): on v7x call with batch_block=N//2 (2-TC split) and
    # use_bf16_mxu=True (single-pass MXU) once the tolerance is loosened.
    print("KERNEL_OK")
</pallas_src>

<mosaic_0001>
module attributes {stable_mosaic.version = 11 : i64} {
  func.func @_cnn_kernel(%arg0: i32, %arg1: memref<1x256xf32, #tpu.memory_space<vmem>>, %arg2: memref<80x161xf32, #tpu.memory_space<vmem>>, %arg3: memref<1x256xf32, #tpu.memory_space<vmem>>) attributes {dimension_semantics = [#tpu.dimension_semantics<parallel>], iteration_bounds = array<i64: 1>, scalar_prefetch = 0 : i64, scratch_operands = 0 : i64, tpu.core_type = #tpu.core_type<tc>, window_params = [{transform_indices = @transform_0, window_bounds = array<i64: 1, 256>}, {pipeline_mode = #tpu.pipeline_mode<synchronous>, transform_indices = @transform_1, window_bounds = array<i64: 80, 161>}, {transform_indices = @transform_2, window_bounds = array<i64: 1, 256>}]} {
    %0 = tpu.iota {dimensions = array<i32: 1>} : vector<1x256xi32>
    %c128_i32 = arith.constant 128 : i32
    %c0_i32 = arith.constant 0 : i32
    %1 = arith.cmpi eq, %c128_i32, %c0_i32 : i32
    %c1_i32 = arith.constant 1 : i32
    %2 = arith.select %1, %c1_i32, %c128_i32 : i32
    %3 = vector.broadcast %2 : i32 to vector<1x256xi32>
    %4 = arith.remsi %0, %3 : vector<1x256xi32>
    %c0_i32_0 = arith.constant 0 : i32
    %5 = vector.broadcast %c0_i32_0 : i32 to vector<1x256xi32>
    %6 = arith.cmpi ne, %4, %5 : vector<1x256xi32>
    %c0_i32_1 = arith.constant 0 : i32
    %7 = vector.broadcast %c0_i32_1 : i32 to vector<1x256xi32>
    %8 = arith.cmpi slt, %4, %7 : vector<1x256xi32>
    %c0_i32_2 = arith.constant 0 : i32
    %9 = arith.cmpi slt, %2, %c0_i32_2 : i32
    %10 = vector.broadcast %9 : i1 to vector<1x256xi1>
    %11 = vector.broadcast %10 : vector<1x256xi1> to vector<1x256xi1>
    %12 = arith.xori %8, %11 : vector<1x256xi1>
    %13 = arith.andi %12, %6 : vector<1x256xi1>
    %14 = vector.broadcast %2 : i32 to vector<1x256xi32>
    %15 = arith.addi %4, %14 : vector<1x256xi32>
    %16 = arith.select %13, %15, %4 : vector<1x256xi1>, vector<1x256xi32>
    %c100_i32 = arith.constant 100 : i32
    %17 = vector.broadcast %c100_i32 : i32 to vector<1x256xi32>
    %18 = arith.cmpi slt, %16, %17 : vector<1x256xi32>
    %c0 = arith.constant 0 : index
    %c0_3 = arith.constant 0 : index
    %19 = vector.load %arg2[%c0, %c0_3] : memref<80x161xf32, #tpu.memory_space<vmem>>, vector<32x80xf32>
    %c32 = arith.constant 32 : index
    %c0_4 = arith.constant 0 : index
    %20 = vector.load %arg2[%c32, %c0_4] : memref<80x161xf32, #tpu.memory_space<vmem>>, vector<16x160xf32>
    %c48 = arith.constant 48 : index
    %c0_5 = arith.constant 0 : index
    %21 = vector.load %arg2[%c48, %c0_5] : memref<80x161xf32, #tpu.memory_space<vmem>>, vector<16x5xf32>
    %c64 = arith.constant 64 : index
    %c0_6 = arith.constant 0 : index
    %22 = vector.load %arg2[%c64, %c0_6] : memref<80x161xf32, #tpu.memory_space<vmem>>, vector<16x5xf32>
    %c0_7 = arith.constant 0 : index
    %c160 = arith.constant 160 : index
    %23 = vector.load %arg2[%c0_7, %c160] : memref<80x161xf32, #tpu.memory_space<vmem>>, vector<32x1xf32>
    %c32_8 = arith.constant 32 : index
    %c160_9 = arith.constant 160 : index
    %24 = vector.load %arg2[%c32_8, %c160_9] : memref<80x161xf32, #tpu.memory_space<vmem>>, vector<16x1xf32>
    %c48_10 = arith.constant 48 : index
    %c160_11 = arith.constant 160 : index
    %25 = vector.load %arg2[%c48_10, %c160_11] : memref<80x161xf32, #tpu.memory_space<vmem>>, vector<16x1xf32>
    %c64_12 = arith.constant 64 : index
    %c160_13 = arith.constant 160 : index
    %26 = vector.load %arg2[%c64_12, %c160_13] : memref<80x161xf32, #tpu.memory_space<vmem>>, vector<1x1xf32>
    %c0_14 = arith.constant 0 : index
    %c0_15 = arith.constant 0 : index
    %27 = vector.load %arg1[%c0_14, %c0_15] : memref<1x256xf32, #tpu.memory_space<vmem>>, vector<1x256xf32>
    %28 = vector.extract_strided_slice %21 {offsets = [0, 0], sizes = [16, 1], strides = [1, 1]} : vector<16x5xf32> to vector<16x1xf32>
    %c2_i32 = arith.constant 2 : i32
    %29 = tpu.dynamic_rotate %27 by %c2_i32 dim 1 : vector<1x256xf32>, i32 -> vector<1x256xf32>
    %30 = vector.broadcast %28 : vector<16x1xf32> to vector<16x256xf32>
    %31 = vector.broadcast %29 : vector<1x256xf32> to vector<16x256xf32>
    %32 = arith.mulf %30, %31 : vector<16x256xf32>
    %33 = vector.extract_strided_slice %21 {offsets = [0, 1], sizes = [16, 1], strides = [1, 1]} : vector<16x5xf32> to vector<16x1xf32>
    %c1_i32_16 = arith.constant 1 : i32
    %34 = tpu.dynamic_rotate %27 by %c1_i32_16 dim 1 : vector<1x256xf32>, i32 -> vector<1x256xf32>
    %35 = vector.broadcast %33 : vector<16x1xf32> to vector<16x256xf32>
    %36 = vector.broadcast %34 : vector<1x256xf32> to vector<16x256xf32>
    %37 = arith.mulf %35, %36 : vector<16x256xf32>
    %38 = arith.addf %32, %37 : vector<16x256xf32>
    %39 = vector.extract_strided_slice %21 {offsets = [0, 2], sizes = [16, 1], strides = [1, 1]} : vector<16x5xf32> to vector<16x1xf32>
    %40 = vector.broadcast %39 : vector<16x1xf32> to vector<16x256xf32>
    %41 = vector.broadcast %27 : vector<1x256xf32> to vector<16x256xf32>
    %42 = arith.mulf %40, %41 : vector<16x256xf32>
    %43 = arith.addf %38, %42 : vector<16x256xf32>
    %44 = vector.extract_strided_slice %21 {offsets = [0, 3], sizes = [16, 1], strides = [1, 1]} : vector<16x5xf32> to vector<16x1xf32>
    %c255_i32 = arith.constant 255 : i32
    %45 = tpu.dynamic_rotate %27 by %c255_i32 dim 1 : vector<1x256xf32>, i32 -> vector<1x256xf32>
    %46 = vector.broadcast %44 : vector<16x1xf32> to vector<16x256xf32>
    %47 = vector.broadcast %45 : vector<1x256xf32> to vector<16x256xf32>
    %48 = arith.mulf %46, %47 : vector<16x256xf32>
    %49 = arith.addf %43, %48 : vector<16x256xf32>
    %50 = vector.extract_strided_slice %21 {offsets = [0, 4], sizes = [16, 1], strides = [1, 1]} : vector<16x5xf32> to vector<16x1xf32>
    %c254_i32 = arith.constant 254 : i32
    %51 = tpu.dynamic_rotate %27 by %c254_i32 dim 1 : vector<1x256xf32>, i32 -> vector<1x256xf32>
    %52 = vector.broadcast %50 : vector<16x1xf32> to vector<16x256xf32>
    %53 = vector.broadcast %51 : vector<1x256xf32> to vector<16x256xf32>
    %54 = arith.mulf %52, %53 : vector<16x256xf32>
    %55 = arith.addf %49, %54 : vector<16x256xf32>
    %56 = vector.broadcast %25 : vector<16x1xf32> to vector<16x256xf32>
    %57 = arith.addf %55, %56 : vector<16x256xf32>
    %cst = arith.constant 0.000000e+00 : f32
    %58 = vector.broadcast %cst : f32 to vector<16x256xf32>
    %59 = arith.maximumf %57, %58 : vector<16x256xf32>
    %cst_17 = arith.constant 0.000000e+00 : f32
    %60 = vector.shape_cast %18 : vector<1x256xi1> to vector<1x256xi1>
    %61 = vector.broadcast %60 : vector<1x256xi1> to vector<16x256xi1>
    %62 = vector.broadcast %cst_17 : f32 to vector<16x256xf32>
    %63 = arith.select %61, %59, %62 : vector<16x256xi1>, vector<16x256xf32>
    %c2_i32_18 = arith.constant 2 : i32
    %64 = tpu.dynamic_rotate %63 by %c2_i32_18 dim 1 : vector<16x256xf32>, i32 -> vector<16x256xf32>
    %c1_i32_19 = arith.constant 1 : i32
    %65 = tpu.dynamic_rotate %63 by %c1_i32_19 dim 1 : vector<16x256xf32>, i32 -> vector<16x256xf32>
    %c255_i32_20 = arith.constant 255 : i32
    %66 = tpu.dynamic_rotate %63 by %c255_i32_20 dim 1 : vector<16x256xf32>, i32 -> vector<16x256xf32>
    %c254_i32_21 = arith.constant 254 : i32
    %67 = tpu.dynamic_rotate %63 by %c254_i32_21 dim 1 : vector<16x256xf32>, i32 -> vector<16x256xf32>
    %68 = tpu.concatenate %64, %65, %63, %66, %67 in 0 : vector<16x256xf32>, vector<16x256xf32>, vector<16x256xf32>, vector<16x256xf32>, vector<16x256xf32> -> vector<80x256xf32>
    %cst_22 = arith.constant dense<0.000000e+00> : vector<32x256xf32>
    %69 = tpu.matmul %19, %68, %cst_22 {dimension_numbers = #tpu.dot_dimension_numbers<[1], [0], [0], [1], [0, 0, 1, 1], [], []>} : vector<32x80xf32>, vector<80x256xf32>, vector<32x256xf32> -> vector<32x256xf32>
    %70 = vector.broadcast %23 : vector<32x1xf32> to vector<32x256xf32>
    %71 = arith.addf %69, %70 : vector<32x256xf32>
    %cst_23 = arith.constant 0.000000e+00 : f32
    %72 = vector.broadcast %cst_23 : f32 to vector<32x256xf32>
    %73 = arith.maximumf %71, %72 : vector<32x256xf32>
    %cst_24 = arith.constant 0.000000e+00 : f32
    %74 = vector.shape_cast %18 : vector<1x256xi1> to vector<1x256xi1>
    %75 = vector.broadcast %74 : vector<1x256xi1> to vector<32x256xi1>
    %76 = vector.broadcast %cst_24 : f32 to vector<32x256xf32>
    %77 = arith.select %75, %73, %76 : vector<32x256xi1>, vector<32x256xf32>
    %c2_i32_25 = arith.constant 2 : i32
    %78 = tpu.dynamic_rotate %77 by %c2_i32_25 dim 1 : vector<32x256xf32>, i32 -> vector<32x256xf32>
    %c1_i32_26 = arith.constant 1 : i32
    %79 = tpu.dynamic_rotate %77 by %c1_i32_26 dim 1 : vector<32x256xf32>, i32 -> vector<32x256xf32>
    %c255_i32_27 = arith.constant 255 : i32
    %80 = tpu.dynamic_rotate %77 by %c255_i32_27 dim 1 : vector<32x256xf32>, i32 -> vector<32x256xf32>
    %c254_i32_28 = arith.constant 254 : i32
    %81 = tpu.dynamic_rotate %77 by %c254_i32_28 dim 1 : vector<32x256xf32>, i32 -> vector<32x256xf32>
    %82 = tpu.concatenate %78, %79, %77, %80, %81 in 0 : vector<32x256xf32>, vector<32x256xf32>, vector<32x256xf32>, vector<32x256xf32>, vector<32x256xf32> -> vector<160x256xf32>
    %cst_29 = arith.constant dense<0.000000e+00> : vector<16x256xf32>
    %83 = tpu.matmul %20, %82, %cst_29 {dimension_numbers = #tpu.dot_dimension_numbers<[1], [0], [0], [1], [0, 0, 1, 1], [], []>} : vector<16x160xf32>, vector<160x256xf32>, vector<16x256xf32> -> vector<16x256xf32>
    %84 = vector.broadcast %24 : vector<16x1xf32> to vector<16x256xf32>
    %85 = arith.addf %83, %84 : vector<16x256xf32>
    %cst_30 = arith.constant 0.000000e+00 : f32
    %86 = vector.broadcast %cst_30 : f32 to vector<16x256xf32>
    %87 = arith.maximumf %85, %86 : vector<16x256xf32>
    %cst_31 = arith.constant 0.000000e+00 : f32
    %88 = vector.shape_cast %18 : vector<1x256xi1> to vector<1x256xi1>
    %89 = vector.broadcast %88 : vector<1x256xi1> to vector<16x256xi1>
    %90 = vector.broadcast %cst_31 : f32 to vector<16x256xf32>
    %91 = arith.select %89, %87, %90 : vector<16x256xi1>, vector<16x256xf32>
    %92 = vector.extract_strided_slice %22 {offsets = [0, 0], sizes = [16, 1], strides = [1, 1]} : vector<16x5xf32> to vector<16x1xf32>
    %c2_i32_32 = arith.constant 2 : i32
    %93 = tpu.dynamic_rotate %91 by %c2_i32_32 dim 1 : vector<16x256xf32>, i32 -> vector<16x256xf32>
    %94 = vector.broadcast %92 : vector<16x1xf32> to vector<16x256xf32>
    %95 = arith.mulf %94, %93 : vector<16x256xf32>
    %96 = vector.extract_strided_slice %22 {offsets = [0, 1], sizes = [16, 1], strides = [1, 1]} : vector<16x5xf32> to vector<16x1xf32>
    %c1_i32_33 = arith.constant 1 : i32
    %97 = tpu.dynamic_rotate %91 by %c1_i32_33 dim 1 : vector<16x256xf32>, i32 -> vector<16x256xf32>
    %98 = vector.broadcast %96 : vector<16x1xf32> to vector<16x256xf32>
    %99 = arith.mulf %98, %97 : vector<16x256xf32>
    %100 = arith.addf %95, %99 : vector<16x256xf32>
    %101 = vector.extract_strided_slice %22 {offsets = [0, 2], sizes = [16, 1], strides = [1, 1]} : vector<16x5xf32> to vector<16x1xf32>
    %102 = vector.broadcast %101 : vector<16x1xf32> to vector<16x256xf32>
    %103 = arith.mulf %102, %91 : vector<16x256xf32>
    %104 = arith.addf %100, %103 : vector<16x256xf32>
    %105 = vector.extract_strided_slice %22 {offsets = [0, 3], sizes = [16, 1], strides = [1, 1]} : vector<16x5xf32> to vector<16x1xf32>
    %c255_i32_34 = arith.constant 255 : i32
    %106 = tpu.dynamic_rotate %91 by %c255_i32_34 dim 1 : vector<16x256xf32>, i32 -> vector<16x256xf32>
    %107 = vector.broadcast %105 : vector<16x1xf32> to vector<16x256xf32>
    %108 = arith.mulf %107, %106 : vector<16x256xf32>
    %109 = arith.addf %104, %108 : vector<16x256xf32>
    %110 = vector.extract_strided_slice %22 {offsets = [0, 4], sizes = [16, 1], strides = [1, 1]} : vector<16x5xf32> to vector<16x1xf32>
    %c254_i32_35 = arith.constant 254 : i32
    %111 = tpu.dynamic_rotate %91 by %c254_i32_35 dim 1 : vector<16x256xf32>, i32 -> vector<16x256xf32>
    %112 = vector.broadcast %110 : vector<16x1xf32> to vector<16x256xf32>
    %113 = arith.mulf %112, %111 : vector<16x256xf32>
    %114 = arith.addf %109, %113 : vector<16x256xf32>
    %cst_36 = arith.constant dense<0.000000e+00> : vector<256xf32>
    %115 = vector.multi_reduction <add>, %114, %cst_36 [0] : vector<16x256xf32> to vector<256xf32>
    %116 = vector.shape_cast %115 : vector<256xf32> to vector<1x256xf32>
    %117 = vector.broadcast %26 : vector<1x1xf32> to vector<1x256xf32>
    %118 = arith.addf %116, %117 : vector<1x256xf32>
    %c0_37 = arith.constant 0 : index
    %c0_38 = arith.constant 0 : index
    %119 = vector.load %arg3[%c0_37, %c0_38] : memref<1x256xf32, #tpu.memory_space<vmem>>, vector<1x256xf32>
    tpu.vector_store %arg3[%c0_37, %c0_38], %118 {strides = array<i32>} : memref<1x256xf32, #tpu.memory_space<vmem>>, vector<1x256xf32>,
    return
  }
  func.func @transform_0(%arg0: i32) -> (i32, i32) {
    %c0_i32 = arith.constant 0 : i32
    %c0_i32_0 = arith.constant 0 : i32
    return %c0_i32, %arg0 : i32, i32
  }
  func.func @transform_1(%arg0: i32) -> (i32, i32) {
    %c0_i32 = arith.constant 0 : i32
    %c0_i32_0 = arith.constant 0 : i32
    %c0_i32_1 = arith.constant 0 : i32
    return %c0_i32, %c0_i32_0 : i32, i32
  }
  func.func @transform_2(%arg0: i32) -> (i32, i32) {
    %c0_i32 = arith.constant 0 : i32
    %c0_i32_0 = arith.constant 0 : i32
    return %c0_i32, %arg0 : i32, i32
  }
}

</mosaic_0001>

<llo_original>
// kernel: tpu_custom_call.1
$region0: #{tpu_custom_call.1}
  #allocation0 [shape = 'u32[]', space=smem, size = 0x4, offset = 0x4, fixed_abs, tag = 'smem constant byte address 0x4 - core index']
  #allocation1 [shape = 'u32[144,128]{1,0:T(1,128)}', space=vmem, size = 0x12000, scoped, tag = 'internal scratch']
  %s0 = inlined_call_operand.hbm [shape: f32[1,256], index: 0, kind: input, shape index: {}]
  %s1 = inlined_call_operand.hbm [shape: f32[80,161], index: 1, kind: input, shape index: {}]
  %s2 = inlined_call_operand.hbm [shape: f32[1,256], index: 2, kind: output, shape index: {}]
  %s3 = sld [smem:[#allocation0]]
  $region26: #{tpu_custom_call.1} parent=0
    _
  %s5 = ssub.s32 1, %s3
  %s6 = scalar_select 0, %s5, %s3
  $region1: #{tpu_custom_call.1} parent=0
    #allocation2 [shape = 'u8[1024]{0}', space=vmem, size = 0x400, scoped, tag = 'input window, operand 0, single buffered']
    #allocation3 [shape = 's32[1]{0}', space=sflag, size = 0x4, scoped, tag = 'scoped memory for tpu_custom_call.1']
    #allocation4 [shape = 's32[1]{0}', space=sflag, size = 0x4, scoped, tag = 'scoped memory for tpu_custom_call.1']
    #allocation5 [shape = 'u8[81920]{0}', space=vmem, size = 0x14000, scoped, tag = 'input window, operand 1, single buffered']
    #allocation6 [shape = 's32[1]{0}', space=sflag, size = 0x4, scoped, tag = 'scoped memory for tpu_custom_call.1']
    #allocation7 [shape = 'u8[1024]{0}', space=vmem, size = 0x400, scoped, tag = 'output window, operand 0, single buffered']
    %7 = vsyncpa [#allocation3], 0
    %8 = vsyncpa [#allocation6], 0
    %9 = vsyncpa [#allocation4], 0
    // Predicated region
    $region2: #{tpu_custom_call.1} parent=1 // pred_check
      _
    $region3: #{tpu_custom_call.1} parent=1 // pred_check_branch
      %11 = sbr.rel (0) target = $region5
    $region4: #{tpu_custom_call.1} parent=1 // pred_region
      %s13 = ssub.s32 32, 32
      %14 = vsyncadd [#allocation3], %s13
      %s16 = sshll.u32 [#allocation2], 4
      %s17 = int_to_ptr.vmem [resolvable:$true] %s16
      %19 = dma.hbm_to_vmem [thread:$0]  %s0, 32, %s17, [#allocation3]
    $region5: #{tpu_custom_call.1} parent=1 // pred_fallthru
      _
    // Predicated region
    $region6: #{tpu_custom_call.1} parent=1 // pred_check
      _
    $region7: #{tpu_custom_call.1} parent=1 // pred_check_branch
      %21 = sbr.rel (0) target = $region9
    $region8: #{tpu_custom_call.1} parent=1 // pred_region
      %s23 = ssub.s32 2560, 2560
      %24 = vsyncadd [#allocation6], %s23
      %s25 = sshll.u32 [#allocation5], 4
      %s26 = int_to_ptr.vmem [resolvable:$true] %s25
      %31 = dma.hbm_to_vmem [thread:$0]  %s1, 2560, %s26, [#allocation6], 256, 256, 16
    $region9: #{tpu_custom_call.1} parent=1 // pred_fallthru
      _
    // Predicated region
    $region10: #{tpu_custom_call.1} parent=1 // pred_check
      _
    $region11: #{tpu_custom_call.1} parent=1 // pred_check_branch
      %33 = sbr.rel (0) target = $region13
    $region12: #{tpu_custom_call.1} parent=1 // pred_region
      %34 = dma.done [#allocation3], 32
    $region13: #{tpu_custom_call.1} parent=1 // pred_fallthru
      _
    // Predicated region
    $region14: #{tpu_custom_call.1} parent=1 // pred_check
      _
    $region15: #{tpu_custom_call.1} parent=1 // pred_check_branch
      %36 = sbr.rel (0) target = $region17
    $region16: #{tpu_custom_call.1} parent=1 // pred_region
      %37 = dma.done [#allocation6], 2560
    $region17: #{tpu_custom_call.1} parent=1 // pred_fallthru
      _
    %v38 = vlaneseq
    %v39 = vand.u32 %v38, 127
    %v40 = vadd.s32 %v39, 128
    %vm41 = vcmp.lt.s32.totalorder %v39, 0
    %v42 = vsub.s32 0, %v39
    %v43 = vsel %vm41, %v42, %v39
    %v44 = vshrl.u32 %v43, 7
    %v45 = vand.u32 %v43, 127
    %v46 = vsub.s32 0, %v45
    %v47 = vsel %vm41, %v46, %v45
    %vm48 = vcmp.lt.s32.totalorder %v40, 0
    %v49 = vsub.s32 0, %v40
    %v50 = vsel %vm48, %v49, %v40
    %v51 = vshrl.u32 %v50, 7
    %v52 = vand.u32 %v50, 127
    %v53 = vsub.s32 0, %v52
    %v54 = vsel %vm48, %v53, %v52
    %vm55 = vcmp.ne.s32.totalorder %v47, 0
    %vm56 = vcmp.ne.s32.totalorder %v54, 0
    %vm57 = vcmp.lt.s32.totalorder %v47, 0
    %vm58 = vcmp.lt.s32.totalorder %v54, 0
    %vm59 = vmand %vm57, %vm55
    %vm60 = vmand %vm58, %vm56
    %v61 = vadd.s32 %v47, 128
    %v62 = vadd.s32 %v54, 128
    %v63 = vsel %vm59, %v61, %v47
    %v64 = vsel %vm60, %v62, %v54
    %vm65 = vcmp.lt.s32.totalorder %v63, 100
    %vm66 = vcmp.lt.s32.totalorder %v64, 100
    %v67 = vld [vmem:[#allocation5] sm:$0xff]
    %v68 = vld [vmem:[#allocation5 + $0x10] sm:$0xff]
    %v69 = vld [vmem:[#allocation5 + $0x20] sm:$0xff]
    %v70 = vld [vmem:[#allocation5 + $0x30] sm:$0xff]
    %v71 = vld [vmem:[#allocation5 + $0x40] sm:$0xff]
    %v72 = vld [vmem:[#allocation5 + $0x48] sm:$0xff]
    %v73 = vld [vmem:[#allocation5 + $0x50] sm:$0xff]
    %v74 = vld [vmem:[#allocation5 + $0x58] sm:$0xff]
    %v75 = vld [vmem:[#allocation5 + $0x60] sm:$0xff]
    %v76 = vld [vmem:[#allocation5 + $0x70] sm:$0xff]
    %v77 = vld [vmem:[#allocation5 + $0x80] sm:$0xff]
    %v78 = vld [vmem:[#allocation5 + $0x90] sm:$0xff]
    %v79 = vld [vmem:[#allocation5 + $0x8] sm:$0xff]
    %v80 = vld [vmem:[#allocation5 + $0x18] sm:$0xff]
    %v81 = vld [vmem:[#allocation5 + $0x28] sm:$0xff]
    %v82 = vld [vmem:[#allocation5 + $0x38] sm:$0xff]
    %v83 = vld [vmem:[#allocation5 + $0x68] sm:$0xff]
    %v84 = vld [vmem:[#allocation5 + $0x78] sm:$0xff]
    %v85 = vld [vmem:[#allocation5 + $0x88] ss:$0 sm:$0xff]
    %v86 = vld [vmem:[#allocation2] sm:$0x3]
    %v88 = vlaneseq
    %v89 = vshrl.u32 %v88, 7
    %v90 = vsub.s32 0, %v89
    %v91 = vrot.slane %v86, %v90
    %v92 = vlaneseq
    %v93 = vshrl.u32 %v92, 7
    %v94 = vsub.s32 1, %v93
    %v95 = vrot.slane %v86, %v94
    %98 = vrot.lane.b32.xlu0 %v91, 2
    %v99 = vpop.permute.xlu0 %98
    %100 = vrot.lane.b32.xlu0 %v95, 2
    %v101 = vpop.permute.xlu0 %100
    %vm102 = vcmp.lt.s32.totalorder %v39, 2
    %v103 = vsel %vm102, %v99, %v101
    %v104 = vsel %vm102, %v101, %v99
    %106 = vset.pattern.permute.xlu0 0
    %107 = vperm.xlu0 %106, %v75
    %v108 = vpop.permute.xlu0 %107
    %111 = vset.pattern.permute.xlu0 0
    %112 = vperm.xlu0 %111, %v76
    %v113 = vpop.permute.xlu0 %112
    %v115 = vlaneseq
    %v116 = vshrl.u32 %v115, 7
    %v117 = vsub.s32 0, %v116
    %v118 = vrot.slane %v104, %v117
    %v119 = vlaneseq
    %v120 = vshrl.u32 %v119, 7
    %v121 = vsub.s32 0, %v120
    %v122 = vrot.slane %v103, %v121
    %v123 = vmul.f32 %v108, %v118
    %v124 = vmul.f32 %v108, %v122
    %v125 = vmul.f32 %v113, %v118
    %v126 = vmul.f32 %v113, %v122
    %127 = vrot.lane.b32.xlu0 %v91, 1
    %v128 = vpop.permute.xlu0 %127
    %129 = vrot.lane.b32.xlu0 %v95, 1
    %v130 = vpop.permute.xlu0 %129
    %vm131 = vcmp.lt.s32.totalorder %v39, 1
    %v132 = vsel %vm131, %v128, %v130
    %v133 = vsel %vm131, %v130, %v128
    %134 = vset.pattern.permute.xlu0 1
    %135 = vperm.xlu0 %134, %v75
    %v136 = vpop.permute.xlu0 %135
    %138 = vset.pattern.permute.xlu0 1
    %139 = vperm.xlu0 %138, %v76
    %v140 = vpop.permute.xlu0 %139
    %v142 = vlaneseq
    %v143 = vshrl.u32 %v142, 7
    %v144 = vsub.s32 0, %v143
    %v145 = vrot.slane %v133, %v144
    %v146 = vlaneseq
    %v147 = vshrl.u32 %v146, 7
    %v148 = vsub.s32 0, %v147
    %v149 = vrot.slane %v132, %v148
    %v150 = vmul.f32 %v136, %v145
    %v151 = vmul.f32 %v136, %v149
    %v152 = vmul.f32 %v140, %v145
    %v153 = vmul.f32 %v140, %v149
    %v154 = vadd.f32 %v123, %v150
    %v155 = vadd.f32 %v124, %v151
    %v156 = vadd.f32 %v125, %v152
    %v157 = vadd.f32 %v126, %v153
    %158 = vset.pattern.permute.xlu0 2
    %159 = vperm.xlu0 %158, %v75
    %v160 = vpop.permute.xlu0 %159
    %162 = vset.pattern.permute.xlu0 2
    %163 = vperm.xlu0 %162, %v76
    %v164 = vpop.permute.xlu0 %163
    %v166 = vmul.f32 %v160, %v91
    %v167 = vmul.f32 %v160, %v95
    %v168 = vmul.f32 %v164, %v91
    %v169 = vmul.f32 %v164, %v95
    %v170 = vadd.f32 %v154, %v166
    %v171 = vadd.f32 %v155, %v167
    %v172 = vadd.f32 %v156, %v168
    %v173 = vadd.f32 %v157, %v169
    %174 = vrot.lane.b32.xlu0 %v91, 127
    %v175 = vpop.permute.xlu0 %174
    %176 = vrot.lane.b32.xlu0 %v95, 127
    %v177 = vpop.permute.xlu0 %176
    %vm178 = vcmp.lt.s32.totalorder %v39, 127
    %v179 = vsel %vm178, %v175, %v177
    %v180 = vsel %vm178, %v177, %v175
    %181 = vset.pattern.permute.xlu0 3
    %182 = vperm.xlu0 %181, %v75
    %v183 = vpop.permute.xlu0 %182
    %185 = vset.pattern.permute.xlu0 3
    %186 = vperm.xlu0 %185, %v76
    %v187 = vpop.permute.xlu0 %186
    %v189 = vlaneseq
    %v190 = vshrl.u32 %v189, 7
    %v191 = vsub.s32 0, %v190
    %v192 = vrot.slane %v179, %v191
    %v193 = vlaneseq
    %v194 = vshrl.u32 %v193, 7
    %v195 = vsub.s32 0, %v194
    %v196 = vrot.slane %v180, %v195
    %v197 = vmul.f32 %v183, %v192
    %v198 = vmul.f32 %v183, %v196
    %v199 = vmul.f32 %v187, %v192
    %v200 = vmul.f32 %v187, %v196
    %v201 = vadd.f32 %v170, %v197
    %v202 = vadd.f32 %v171, %v198
    %v203 = vadd.f32 %v172, %v199
    %v204 = vadd.f32 %v173, %v200
    %205 = vrot.lane.b32.xlu0 %v91, 126
    %v206 = vpop.permute.xlu0 %205
    %207 = vrot.lane.b32.xlu0 %v95, 126
    %v208 = vpop.permute.xlu0 %207
    %vm209 = vcmp.lt.s32.totalorder %v39, 126
    %v210 = vsel %vm209, %v206, %v208
    %v211 = vsel %vm209, %v208, %v206
    %212 = vset.pattern.permute.xlu0 4
    %213 = vperm.xlu0 %212, %v75
    %v214 = vpop.permute.xlu0 %213
    %216 = vset.pattern.permute.xlu0 4
    %217 = vperm.xlu0 %216, %v76
    %v218 = vpop.permute.xlu0 %217
    %v220 = vlaneseq
    %v221 = vshrl.u32 %v220, 7
    %v222 = vsub.s32 0, %v221
    %v223 = vrot.slane %v210, %v222
    %v224 = vlaneseq
    %v225 = vshrl.u32 %v224, 7
    %v226 = vsub.s32 0, %v225
    %v227 = vrot.slane %v211, %v226
    %v228 = vmul.f32 %v214, %v223
    %v229 = vmul.f32 %v214, %v227
    %v230 = vmul.f32 %v218, %v223
    %v231 = vmul.f32 %v218, %v227
    %v232 = vadd.f32 %v201, %v228
    %v233 = vadd.f32 %v202, %v229
    %v234 = vadd.f32 %v203, %v230
    %v235 = vadd.f32 %v204, %v231
    %237 = vset.pattern.permute.xlu0 32
    %238 = vperm.xlu0 %237, %v83
    %v239 = vpop.permute.xlu0 %238
    %242 = vset.pattern.permute.xlu0 32
    %243 = vperm.xlu0 %242, %v84
    %v244 = vpop.permute.xlu0 %243
    %v246 = vadd.f32 %v232, %v239
    %v247 = vadd.f32 %v233, %v239
    %v248 = vadd.f32 %v234, %v244
    %v249 = vadd.f32 %v235, %v244
    %v250 = vmax.f32 %v246, 0.0
    %v251 = vmax.f32 %v247, 0.0
    %v252 = vmax.f32 %v248, 0.0
    %v253 = vmax.f32 %v249, 0.0
    %v254 = vsel %vm65, 1, 0
    %v255 = vsel %vm66, 1, 0
    %vm256 = vcmp.eq.s32.totalorder %v254, 1
    %vm257 = vcmp.eq.s32.totalorder %v255, 1
    %v258 = vsel %vm256, %v250, 0.0
    %v259 = vsel %vm257, %v251, 0.0
    %v260 = vsel %vm256, %v252, 0.0
    %v261 = vsel %vm257, %v253, 0.0
    %262 = vrot.lane.b32.xlu0 %v258, 2
    %v263 = vpop.permute.xlu0 %262
    %264 = vrot.lane.b32.xlu0 %v260, 2
    %v265 = vpop.permute.xlu0 %264
    %266 = vrot.lane.b32.xlu0 %v259, 2
    %v267 = vpop.permute.xlu0 %266
    %268 = vrot.lane.b32.xlu0 %v261, 2
    %v269 = vpop.permute.xlu0 %268
    %v270 = vsel %vm102, %v263, %v267
    %v271 = vsel %vm102, %v265, %v269
    %v272 = vsel %vm102, %v267, %v263
    %v273 = vsel %vm102, %v269, %v265
    %274 = vrot.lane.b32.xlu0 %v258, 1
    %v275 = vpop.permute.xlu0 %274
    %276 = vrot.lane.b32.xlu0 %v260, 1
    %v277 = vpop.permute.xlu0 %276
    %278 = vrot.lane.b32.xlu0 %v259, 1
    %v279 = vpop.permute.xlu0 %278
    %280 = vrot.lane.b32.xlu0 %v261, 1
    %v281 = vpop.permute.xlu0 %280
    %v282 = vsel %vm131, %v275, %v279
    %v283 = vsel %vm131, %v277, %v281
    %v284 = vsel %vm131, %v279, %v275
    %v285 = vsel %vm131, %v281, %v277
    %286 = vrot.lane.b32.xlu0 %v258, 127
    %v287 = vpop.permute.xlu0 %286
    %288 = vrot.lane.b32.xlu0 %v260, 127
    %v289 = vpop.permute.xlu0 %288
    %290 = vrot.lane.b32.xlu0 %v259, 127
    %v291 = vpop.permute.xlu0 %290
    %292 = vrot.lane.b32.xlu0 %v261, 127
    %v293 = vpop.permute.xlu0 %292
    %v294 = vsel %vm178, %v287, %v291
    %v295 = vsel %vm178, %v289, %v293
    %v296 = vsel %vm178, %v291, %v287
    %v297 = vsel %vm178, %v293, %v289
    %298 = vrot.lane.b32.xlu0 %v258, 126
    %v299 = vpop.permute.xlu0 %298
    %300 = vrot.lane.b32.xlu0 %v260, 126
    %v301 = vpop.permute.xlu0 %300
    %302 = vrot.lane.b32.xlu0 %v259, 126
    %v303 = vpop.permute.xlu0 %302
    %304 = vrot.lane.b32.xlu0 %v261, 126
    %v305 = vpop.permute.xlu0 %304
    %v306 = vsel %vm209, %v299, %v303
    %v307 = vsel %vm209, %v301, %v305
    %v308 = vsel %vm209, %v303, %v299
    %v309 = vsel %vm209, %v305, %v301
    %311 = vset.pattern.permute.xlu0 32
    %312 = vperm.xlu0 %311, %v79
    %v313 = vpop.permute.xlu0 %312
    %316 = vset.pattern.permute.xlu0 32
    %317 = vperm.xlu0 %316, %v80
    %v318 = vpop.permute.xlu0 %317
    %321 = vset.pattern.permute.xlu0 32
    %322 = vperm.xlu0 %321, %v81
    %v323 = vpop.permute.xlu0 %322
    %326 = vset.pattern.permute.xlu0 32
    %327 = vperm.xlu0 %326, %v82
    %v328 = vpop.permute.xlu0 %327
    %vm330 = vcmask 654336
    %v332 = vsel %vm330, %v67, 0
    %v335 = vsel %vm330, %v68, 0
    %v338 = vsel %vm330, %v69, 0
    %v341 = vsel %vm330, %v70, 0
    %343 = vmatprep.subr.mxu0 %v270
    %344 = vmatpush1.msra.mxu0 %v272
    %345 = vmatprep.subr.mxu0 %v271
    %346 = vmatpush1.msra.mxu0 %v273
    %347 = vmatprep.subr.mxu0 %v282
    %348 = vmatpush1.msra.mxu0 %v284
    %349 = vmatprep.subr.mxu0 %v283
    %350 = vmatpush1.msra.mxu0 %v285
    %351 = vmatprep.subr.mxu0 %v259
    %352 = vmatpush1.msra.mxu0 %v258
    %353 = vmatprep.subr.mxu0 %v261
    %354 = vmatpush1.msra.mxu0 %v260
    %355 = vmatprep.subr.mxu0 %v296
    %356 = vmatpush1.msra.mxu0 %v294
    %357 = vmatprep.subr.mxu0 %v297
    %358 = vmatpush1.msra.mxu0 %v295
    %359 = vmatprep.subr.mxu0 %v308
    %360 = vmatpush1.msra.mxu0 %v306
    %361 = vmatprep.subr.mxu0 %v309
    %362 = vmatpush1.msra.mxu0 %v307
    %363 = vmatprep.subr.mxu0 0.0
    %364 = vmatpush1.msra.mxu0 0.0
    %365 = vmatprep.subr.mxu0 0.0
    %366 = vmatpush1.msra.mxu0 0.0
    %367 = vmatprep.subr.mxu0 0.0
    %368 = vmatpush1.msra.mxu0 0.0
    %369 = vmatprep.subr.mxu0 0.0
    %370 = vmatpush1.msra.mxu0 0.0
    %371 = vmatprep.subr.mxu0 0.0
    %372 = vmatpush1.msra.mxu0 0.0
    %373 = vmatprep.subr.mxu0 0.0
    %374 = vmatpush1.msra.mxu0 0.0
    %375 = vmatprep.subr.mxu0 0.0
    %376 = vmatpush1.msra.mxu0 0.0
    %377 = vmatprep.subr.mxu0 0.0
    %378 = vmatpush1.msra.mxu0 0.0
    %379 = vmatprep.subr.mxu0 0.0
    %380 = vmatpush1.msra.mxu0 0.0
    %381 = vmatprep.subr.mxu0 0.0
    %382 = vmatpush1.msra.mxu0 0.0
    %383 = vmatprep.subr.mxu0 0.0
    %384 = vmatpush1.msra.mxu0 0.0
    %385 = vmatprep.subr.mxu0 0.0
    %386 = vmatpush1.msra.mxu0 0.0
    %387 = vmatprep.subr.mxu0 0.0
    %388 = vmatpush1.msra.mxu0 0.0
    %389 = vmatprep.subr.mxu0 0.0
    %390 = vmatpush1.msra.mxu0 0.0
    %391 = vmatprep.subr.mxu0 0.0
    %392 = vmatpush1.msra.mxu0 0.0
    %393 = vmatprep.subr.mxu0 0.0
    %394 = vmatpush1.msra.mxu0 0.0
    %395 = vmatprep.subr.mxu0 0.0
    %396 = vmatpush1.msra.mxu0 0.0
    %397 = vmatprep.subr.mxu0 0.0
    %398 = vmatpush1.msra.mxu0 0.0
    %399 = vmatprep.subr.mxu0 0.0
    %400 = vmatpush1.msra.mxu0 0.0
    %401 = vmatprep.subr.mxu0 0.0
    %402 = vmatpush1.msra.mxu0 0.0
    %403 = vmatprep.subr.mxu0 0.0
    %404 = vmatpush1.msra.mxu0 0.0
    %405 = vmatprep.subr.mxu0 0.0
    %406 = vmatpush1.msra.mxu0 0.0
    %407 = vmatprep.mubr.f32.mxu0 0.0
    %408 = vmatmul.mubr.f32.gmra.mrb[0].mxu0 %v332
    %v409 = vpop.f32.mrb[0].mxu0
    %v410 = vadd.f32 %v313, %v409
    %v411 = vpop.f32.mrb[0].mxu0
    %v412 = vadd.f32 %v313, %v411
    %413 = vmatprep.mubr.f32.mxu0 0.0
    %414 = vmatmul.mubr.f32.gmra.mrb[0].mxu0 %v335
    %v415 = vpop.f32.mrb[0].mxu0
    %v416 = vadd.f32 %v318, %v415
    %v417 = vpop.f32.mrb[0].mxu0
    %v418 = vadd.f32 %v318, %v417
    %419 = vmatprep.mubr.f32.mxu0 0.0
    %420 = vmatmul.mubr.f32.gmra.mrb[0].mxu0 %v338
    %v421 = vpop.f32.mrb[0].mxu0
    %v422 = vadd.f32 %v323, %v421
    %v423 = vpop.f32.mrb[0].mxu0
    %v424 = vadd.f32 %v323, %v423
    %425 = vmatprep.mubr.f32.mxu0 0.0
    %426 = vmatmul.mubr.f32.gmra.mrb[0].mxu0 %v341
    %v427 = vpop.f32.mrb[0].mxu0
    %v428 = vadd.f32 %v328, %v427
    %v429 = vpop.f32.mrb[0].mxu0
    %v430 = vadd.f32 %v328, %v429
    %431 = vdwg.mxu0
    %v432 = vmax.f32 %v410, 0.0
    %v433 = vmax.f32 %v412, 0.0
    %v434 = vmax.f32 %v416, 0.0
    %v435 = vmax.f32 %v418, 0.0
    %v436 = vmax.f32 %v422, 0.0
    %v437 = vmax.f32 %v424, 0.0
    %v438 = vmax.f32 %v428, 0.0
    %v439 = vmax.f32 %v430, 0.0
    %v440 = vsel %vm256, %v432, 0.0
    %v441 = vsel %vm257, %v433, 0.0
    %v442 = vsel %vm256, %v434, 0.0
    %v443 = vsel %vm257, %v435, 0.0
    %v444 = vsel %vm256, %v436, 0.0
    %v445 = vsel %vm257, %v437, 0.0
    %v446 = vsel %vm256, %v438, 0.0
    %v447 = vsel %vm257, %v439, 0.0
    %448 = vrot.lane.b32.xlu0 %v440, 2
    %v449 = vpop.permute.xlu0 %448
    %450 = vrot.lane.b32.xlu0 %v442, 2
    %v451 = vpop.permute.xlu0 %450
    %452 = vrot.lane.b32.xlu0 %v444, 2
    %v453 = vpop.permute.xlu0 %452
    %454 = vrot.lane.b32.xlu0 %v446, 2
    %v455 = vpop.permute.xlu0 %454
    %456 = vrot.lane.b32.xlu0 %v441, 2
    %v457 = vpop.permute.xlu0 %456
    %458 = vrot.lane.b32.xlu0 %v443, 2
    %v459 = vpop.permute.xlu0 %458
    %460 = vrot.lane.b32.xlu0 %v445, 2
    %v461 = vpop.permute.xlu0 %460
    %462 = vrot.lane.b32.xlu0 %v447, 2
    %v463 = vpop.permute.xlu0 %462
    %v464 = vsel %vm102, %v449, %v457
    %v465 = vsel %vm102, %v451, %v459
    %v466 = vsel %vm102, %v453, %v461
    %v467 = vsel %vm102, %v455, %v463
    %v468 = vsel %vm102, %v457, %v449
    %v469 = vsel %vm102, %v459, %v451
    %v470 = vsel %vm102, %v461, %v453
    %v471 = vsel %vm102, %v463, %v455
    %472 = vrot.lane.b32.xlu0 %v440, 1
    %v473 = vpop.permute.xlu0 %472
    %474 = vrot.lane.b32.xlu0 %v442, 1
    %v475 = vpop.permute.xlu0 %474
    %476 = vrot.lane.b32.xlu0 %v444, 1
    %v477 = vpop.permute.xlu0 %476
    %478 = vrot.lane.b32.xlu0 %v446, 1
    %v479 = vpop.permute.xlu0 %478
    %480 = vrot.lane.b32.xlu0 %v441, 1
    %v481 = vpop.permute.xlu0 %480
    %482 = vrot.lane.b32.xlu0 %v443, 1
    %v483 = vpop.permute.xlu0 %482
    %484 = vrot.lane.b32.xlu0 %v445, 1
    %v485 = vpop.permute.xlu0 %484
    %486 = vrot.lane.b32.xlu0 %v447, 1
    %v487 = vpop.permute.xlu0 %486
    %v488 = vsel %vm131, %v473, %v481
    %v489 = vsel %vm131, %v475, %v483
    %v490 = vsel %vm131, %v477, %v485
    %v491 = vsel %vm131, %v479, %v487
    %v492 = vsel %vm131, %v481, %v473
    %v493 = vsel %vm131, %v483, %v475
    %v494 = vsel %vm131, %v485, %v477
    %v495 = vsel %vm131, %v487, %v479
    %496 = vrot.lane.b32.xlu0 %v440, 127
    %v497 = vpop.permute.xlu0 %496
    %498 = vrot.lane.b32.xlu0 %v442, 127
    %v499 = vpop.permute.xlu0 %498
    %500 = vrot.lane.b32.xlu0 %v444, 127
    %v501 = vpop.permute.xlu0 %500
    %502 = vrot.lane.b32.xlu0 %v446, 127
    %v503 = vpop.permute.xlu0 %502
    %504 = vrot.lane.b32.xlu0 %v441, 127
    %v505 = vpop.permute.xlu0 %504
    %506 = vrot.lane.b32.xlu0 %v443, 127
    %v507 = vpop.permute.xlu0 %506
    %508 = vrot.lane.b32.xlu0 %v445, 127
    %v509 = vpop.permute.xlu0 %508
    %510 = vrot.lane.b32.xlu0 %v447, 127
    %v511 = vpop.permute.xlu0 %510
    %v512 = vsel %vm178, %v497, %v505
    %v513 = vsel %vm178, %v499, %v507
    %v514 = vsel %vm178, %v501, %v509
    %v515 = vsel %vm178, %v503, %v511
    %v516 = vsel %vm178, %v505, %v497
    %v517 = vsel %vm178, %v507, %v499
    %v518 = vsel %vm178, %v509, %v501
    %v519 = vsel %vm178, %v511, %v503
    %520 = vrot.lane.b32.xlu0 %v440, 126
    %v521 = vpop.permute.xlu0 %520
    %522 = vrot.lane.b32.xlu0 %v442, 126
    %v523 = vpop.permute.xlu0 %522
    %524 = vrot.lane.b32.xlu0 %v444, 126
    %v525 = vpop.permute.xlu0 %524
    %526 = vrot.lane.b32.xlu0 %v446, 126
    %v527 = vpop.permute.xlu0 %526
    %528 = vrot.lane.b32.xlu0 %v441, 126
    %v529 = vpop.permute.xlu0 %528
    %530 = vrot.lane.b32.xlu0 %v443, 126
    %v531 = vpop.permute.xlu0 %530
    %532 = vrot.lane.b32.xlu0 %v445, 126
    %v533 = vpop.permute.xlu0 %532
    %534 = vrot.lane.b32.xlu0 %v447, 126
    %v535 = vpop.permute.xlu0 %534
    %v536 = vsel %vm209, %v521, %v529
    %v537 = vsel %vm209, %v523, %v531
    %v538 = vsel %vm209, %v525, %v533
    %v539 = vsel %vm209, %v527, %v535
    %v540 = vsel %vm209, %v529, %v521
    %v541 = vsel %vm209, %v531, %v523
    %v542 = vsel %vm209, %v533, %v525
    %v543 = vsel %vm209, %v535, %v527
    %545 = vset.pattern.permute.xlu0 32
    %546 = vperm.xlu0 %545, %v72
    %v547 = vpop.permute.xlu0 %546
    %550 = vset.pattern.permute.xlu0 32
    %551 = vperm.xlu0 %550, %v74
    %v552 = vpop.permute.xlu0 %551
    %vm554 = vcmask 261120
    %v555 = vsel %vm554, %v72, 0
    %v557 = vsel %vm554, %v74, 0
    %559 = vmatprep.subr.mxu0 %v464
    %560 = vmatpush1.msra.mxu0 %v468
    %561 = vmatprep.subr.mxu0 %v465
    %562 = vmatpush1.msra.mxu0 %v469
    %563 = vmatprep.subr.mxu0 %v466
    %564 = vmatpush1.msra.mxu0 %v470
    %565 = vmatprep.subr.mxu0 %v467
    %566 = vmatpush1.msra.mxu0 %v471
    %567 = vmatprep.subr.mxu0 %v488
    %568 = vmatpush1.msra.mxu0 %v492
    %569 = vmatprep.subr.mxu0 %v489
    %570 = vmatpush1.msra.mxu0 %v493
    %571 = vmatprep.subr.mxu0 %v490
    %572 = vmatpush1.msra.mxu0 %v494
    %573 = vmatprep.subr.mxu0 %v491
    %574 = vmatpush1.msra.mxu0 %v495
    %575 = vmatprep.subr.mxu0 %v441
    %576 = vmatpush1.msra.mxu0 %v440
    %577 = vmatprep.subr.mxu0 %v443
    %578 = vmatpush1.msra.mxu0 %v442
    %579 = vmatprep.subr.mxu0 %v445
    %580 = vmatpush1.msra.mxu0 %v444
    %581 = vmatprep.subr.mxu0 %v447
    %582 = vmatpush1.msra.mxu0 %v446
    %583 = vmatprep.subr.mxu0 %v516
    %584 = vmatpush1.msra.mxu0 %v512
    %585 = vmatprep.subr.mxu0 %v517
    %586 = vmatpush1.msra.mxu0 %v513
    %587 = vmatprep.subr.mxu0 %v518
    %588 = vmatpush1.msra.mxu0 %v514
    %589 = vmatprep.subr.mxu0 %v519
    %590 = vmatpush1.msra.mxu0 %v515
    %591 = vmatprep.subr.mxu0 %v540
    %592 = vmatpush1.msra.mxu0 %v536
    %593 = vmatprep.subr.mxu0 %v541
    %594 = vmatpush1.msra.mxu0 %v537
    %595 = vmatprep.subr.mxu0 %v542
    %596 = vmatpush1.msra.mxu0 %v538
    %597 = vmatprep.subr.mxu0 %v543
    %598 = vmatpush1.msra.mxu0 %v539
    %599 = vmatprep.subr.mxu0 0.0
    %600 = vmatpush1.msra.mxu0 0.0
    %601 = vmatprep.subr.mxu0 0.0
    %602 = vmatpush1.msra.mxu0 0.0
    %603 = vmatprep.subr.mxu0 0.0
    %604 = vmatpush1.msra.mxu0 0.0
    %605 = vmatprep.subr.mxu0 0.0
    %606 = vmatpush1.msra.mxu0 0.0
    %607 = vmatprep.subr.mxu0 0.0
    %608 = vmatpush1.msra.mxu0 0.0
    %609 = vmatprep.subr.mxu0 0.0
    %610 = vmatpush1.msra.mxu0 0.0
    %611 = vmatprep.subr.mxu0 0.0
    %612 = vmatpush1.msra.mxu0 0.0
    %613 = vmatprep.subr.mxu0 0.0
    %614 = vmatpush1.msra.mxu0 0.0
    %615 = vmatprep.subr.mxu0 0.0
    %616 = vmatpush1.msra.mxu0 0.0
    %617 = vmatprep.subr.mxu0 0.0
    %618 = vmatpush1.msra.mxu0 0.0
    %619 = vmatprep.subr.mxu0 0.0
    %620 = vmatpush1.msra.mxu0 0.0
    %621 = vmatprep.subr.mxu0 0.0
    %622 = vmatpush1.msra.mxu0 0.0
    %623 = vmatprep.mubr.f32.mxu0 %v555
    %624 = vmatmul.mubr.f32.gmra.mrb[0].mxu0 %v71
    %v625 = vpop.f32.mrb[0].mxu0
    %v626 = vadd.f32 %v547, %v625
    %v627 = vpop.f32.mrb[0].mxu0
    %v628 = vadd.f32 %v547, %v627
    %629 = vmatprep.mubr.f32.mxu0 %v557
    %630 = vmatmul.mubr.f32.gmra.mrb[0].mxu0 %v73
    %v631 = vpop.f32.mrb[0].mxu0
    %v632 = vadd.f32 %v552, %v631
    %v633 = vpop.f32.mrb[0].mxu0
    %v634 = vadd.f32 %v552, %v633
    %635 = vdwg.mxu0
    %v636 = vmax.f32 %v626, 0.0
    %v637 = vmax.f32 %v628, 0.0
    %v638 = vmax.f32 %v632, 0.0
    %v639 = vmax.f32 %v634, 0.0
    %v640 = vsel %vm256, %v636, 0.0
    %v641 = vsel %vm257, %v637, 0.0
    %v642 = vsel %vm256, %v638, 0.0
    %v643 = vsel %vm257, %v639, 0.0
    %644 = vrot.lane.b32.xlu0 %v640, 2
    %v645 = vpop.permute.xlu0 %644
    %646 = vrot.lane.b32.xlu0 %v642, 2
    %v647 = vpop.permute.xlu0 %646
    %648 = vrot.lane.b32.xlu0 %v641, 2
    %v649 = vpop.permute.xlu0 %648
    %650 = vrot.lane.b32.xlu0 %v643, 2
    %v651 = vpop.permute.xlu0 %650
    %v652 = vsel %vm102, %v645, %v649
    %v653 = vsel %vm102, %v647, %v651
    %v654 = vsel %vm102, %v649, %v645
    %v655 = vsel %vm102, %v651, %v647
    %657 = vset.pattern.permute.xlu0 0
    %658 = vperm.xlu0 %657, %v77
    %v659 = vpop.permute.xlu0 %658
    %662 = vset.pattern.permute.xlu0 0
    %663 = vperm.xlu0 %662, %v78
    %v664 = vpop.permute.xlu0 %663
    %v666 = vmul.f32 %v659, %v654
    %v667 = vmul.f32 %v659, %v652
    %v668 = vmul.f32 %v664, %v655
    %v669 = vmul.f32 %v664, %v653
    %670 = vrot.lane.b32.xlu0 %v640, 1
    %v671 = vpop.permute.xlu0 %670
    %672 = vrot.lane.b32.xlu0 %v642, 1
    %v673 = vpop.permute.xlu0 %672
    %674 = vrot.lane.b32.xlu0 %v641, 1
    %v675 = vpop.permute.xlu0 %674
    %676 = vrot.lane.b32.xlu0 %v643, 1
    %v677 = vpop.permute.xlu0 %676
    %v678 = vsel %vm131, %v671, %v675
    %v679 = vsel %vm131, %v673, %v677
    %v680 = vsel %vm131, %v675, %v671
    %v681 = vsel %vm131, %v677, %v673
    %682 = vset.pattern.permute.xlu0 1
    %683 = vperm.xlu0 %682, %v77
    %v684 = vpop.permute.xlu0 %683
    %686 = vset.pattern.permute.xlu0 1
    %687 = vperm.xlu0 %686, %v78
    %v688 = vpop.permute.xlu0 %687
    %v690 = vmul.f32 %v684, %v680
    %v691 = vmul.f32 %v684, %v678
    %v692 = vmul.f32 %v688, %v681
    %v693 = vmul.f32 %v688, %v679
    %v694 = vadd.f32 %v666, %v690
    %v695 = vadd.f32 %v667, %v691
    %v696 = vadd.f32 %v668, %v692
    %v697 = vadd.f32 %v669, %v693
    %698 = vset.pattern.permute.xlu0 2
    %699 = vperm.xlu0 %698, %v77
    %v700 = vpop.permute.xlu0 %699
    %702 = vset.pattern.permute.xlu0 2
    %703 = vperm.xlu0 %702, %v78
    %v704 = vpop.permute.xlu0 %703
    %v706 = vmul.f32 %v700, %v640
    %v707 = vmul.f32 %v700, %v641
    %v708 = vmul.f32 %v704, %v642
    %v709 = vmul.f32 %v704, %v643
    %v710 = vadd.f32 %v694, %v706
    %v711 = vadd.f32 %v695, %v707
    %v712 = vadd.f32 %v696, %v708
    %v713 = vadd.f32 %v697, %v709
    %714 = vrot.lane.b32.xlu0 %v640, 127
    %v715 = vpop.permute.xlu0 %714
    %716 = vrot.lane.b32.xlu0 %v642, 127
    %v717 = vpop.permute.xlu0 %716
    %718 = vrot.lane.b32.xlu0 %v641, 127
    %v719 = vpop.permute.xlu0 %718
    %720 = vrot.lane.b32.xlu0 %v643, 127
    %v721 = vpop.permute.xlu0 %720
    %v722 = vsel %vm178, %v715, %v719
    %v723 = vsel %vm178, %v717, %v721
    %v724 = vsel %vm178, %v719, %v715
    %v725 = vsel %vm178, %v721, %v717
    %726 = vset.pattern.permute.xlu0 3
    %727 = vperm.xlu0 %726, %v77
    %v728 = vpop.permute.xlu0 %727
    %730 = vset.pattern.permute.xlu0 3
    %731 = vperm.xlu0 %730, %v78
    %v732 = vpop.permute.xlu0 %731
    %v734 = vmul.f32 %v728, %v722
    %v735 = vmul.f32 %v728, %v724
    %v736 = vmul.f32 %v732, %v723
    %v737 = vmul.f32 %v732, %v725
    %v738 = vadd.f32 %v710, %v734
    %v739 = vadd.f32 %v711, %v735
    %v740 = vadd.f32 %v712, %v736
    %v741 = vadd.f32 %v713, %v737
    %742 = vrot.lane.b32.xlu0 %v640, 126
    %v743 = vpop.permute.xlu0 %742
    %744 = vrot.lane.b32.xlu0 %v642, 126
    %v745 = vpop.permute.xlu0 %744
    %746 = vrot.lane.b32.xlu0 %v641, 126
    %v747 = vpop.permute.xlu0 %746
    %748 = vrot.lane.b32.xlu0 %v643, 126
    %v749 = vpop.permute.xlu0 %748
    %v750 = vsel %vm209, %v743, %v747
    %v751 = vsel %vm209, %v745, %v749
    %v752 = vsel %vm209, %v747, %v743
    %v753 = vsel %vm209, %v749, %v745
    %754 = vset.pattern.permute.xlu0 4
    %755 = vperm.xlu0 %754, %v77
    %v756 = vpop.permute.xlu0 %755
    %758 = vset.pattern.permute.xlu0 4
    %759 = vperm.xlu0 %758, %v78
    %v760 = vpop.permute.xlu0 %759
    %v762 = vmul.f32 %v756, %v750
    %v763 = vmul.f32 %v756, %v752
    %v764 = vmul.f32 %v760, %v751
    %v765 = vmul.f32 %v760, %v753
    %v766 = vadd.f32 %v738, %v762
    %v767 = vadd.f32 %v739, %v763
    %v768 = vadd.f32 %v740, %v764
    %v769 = vadd.f32 %v741, %v765
    %v770 = vadd.f32 %v766, %v768
    %v771 = vrot.slane %v770, 4
    %v772 = vadd.f32 %v770, %v771
    %v773 = vrot.slane %v772, 2
    %v774 = vadd.f32 %v772, %v773
    %v775 = vrot.slane %v774, 1
    %v776 = vadd.f32 %v774, %v775
    %v777 = vadd.f32 %v767, %v769
    %v778 = vrot.slane %v777, 4
    %v779 = vadd.f32 %v777, %v778
    %v780 = vrot.slane %v779, 2
    %v781 = vadd.f32 %v779, %v780
    %v782 = vrot.slane %v781, 1
    %v783 = vadd.f32 %v781, %v782
    %785 = vset.pattern.permute.xlu0 32
    %786 = vperm.xlu0 %785, %v85
    %v787 = vpop.permute.xlu0 %786
    %v789 = vadd.f32 %v776, %v787
    %v790 = vadd.f32 %v783, %v787
    %v793 = vcombine.low %v789, %v790
    %v795 = vunpack.c.l.s4 1966171168
    %v796 = vunpack.c.0.s8 %v795
    %v797 = vlaneseq
    %v798 = vshrl.u32 %v797, 7
    %v799 = vsub.s32 %v796, %v798
    %v800 = vrot.slane %v793, %v799
    %v802 = vunpack.c.l.s4 1966171168
    %v803 = vunpack.c.0.s8 %v802
    %v804 = vlaneseq
    %v805 = vshrl.u32 %v804, 7
    %v806 = vsub.s32 %v803, %v805
    %v807 = vrot.slane %v800, %v806
    %v809 = vlaneseq
    %vm810 = vcmp.ge.s32.totalorder %v809, 0
    %vm811 = vcmp.lt.s32.totalorder %v809, 256
    %vm812 = vmand %vm810, %vm811
    %813 = vst.msk [vmem:[#allocation7] sm:$0x3] %vm812, %v807
    // Predicated region
    $region18: #{tpu_custom_call.1} parent=1 // pred_check
      _
    $region19: #{tpu_custom_call.1} parent=1 // pred_check_branch
      %815 = sbr.rel (0) target = $region21
    $region20: #{tpu_custom_call.1} parent=1 // pred_region
      %s817 = ssub.s32 32, 32
      %818 = vsyncadd [#allocation4], %s817
      %s820 = sshll.u32 [#allocation7], 4
      %s821 = int_to_ptr.vmem [resolvable:$true] %s820
      %823 = dma.vmem_to_hbm [thread:$0]  %s821, 32, %s2, [#allocation4]
    $region21: #{tpu_custom_call.1} parent=1 // pred_fallthru
      _
    // Predicated region
    $region22: #{tpu_custom_call.1} parent=1 // pred_check
      _
    $region23: #{tpu_custom_call.1} parent=1 // pred_check_branch
      %825 = sbr.rel (0) target = $region25
    $region24: #{tpu_custom_call.1} parent=1 // pred_region
      %826 = dma.done [#allocation4], 32
    $region25: #{tpu_custom_call.1} parent=1 // pred_fallthru
      _
    %827 = vsyncpa [#allocation3], 1
    %828 = vsyncpa [#allocation6], 1
    %829 = vsyncpa [#allocation4], 1

</llo_original>
